<compile_context>
chip_gen: v5e
topology: v5e:2x2
jax: 0.10.0
libtpu: 0.0.40
codegen_flags: <defaults>
</compile_context>

<pallas_src>
import functools

import jax
import jax.numpy as jnp
from jax.experimental import pallas as pl
from jax.experimental.pallas import tpu as pltpu

_TB = 8           # f32 sublane tile: 8 batch items per grid step
_LANE = 128
_K_BLK_MAX = 4096


def _tre_kernel(counts_ref, lm0_ref, lm1_ref, out_ref, *, norm):
    # counts_ref : (TB, 1) int32 VMEM      lm0_ref / lm1_ref : (D, TB, k_blk) VMEM
    # out_ref    : (TB, 1) f32   VMEM (resident across the K axis -> accumulator)
    k = pl.program_id(1)
    nk = pl.num_programs(1)
    _, tb, k_blk = lm0_ref.shape

    @pl.when(k == 0)
    def _init():
        out_ref[...] = jnp.zeros_like(out_ref)

    # In-kernel upcast keeps HBM traffic at the (possibly narrow) input dtype.
    diff = lm0_ref[...].astype(jnp.float32) - lm1_ref[...].astype(jnp.float32)
    ssq = jnp.sum(diff * diff, axis=0)          # (TB, k_blk): VPU add across D vregs
    dist = jnp.sqrt(ssq)                        # per-landmark Euclidean distance (EUP)

    # Mask landmarks beyond each item's count (covers wrapper lane padding too).
    cnt = counts_ref[...]                                           # (TB, 1)
    lane_idx = jax.lax.broadcasted_iota(jnp.int32, (tb, k_blk), 1) + k * k_blk
    dist = jnp.where(lane_idx < cnt, dist, 0.0)

    # One cross-lane reduce per 8 items; accumulate into the resident output block.
    out_ref[...] += jnp.sum(dist, axis=-1, keepdims=True)

    @pl.when(k == nk - 1)
    def _finalize():
        denom = jnp.maximum(cnt, 1).astype(jnp.float32)
        tre = out_ref[...] / denom
        if norm == 'l2':
            tre = tre * tre
        out_ref[...] = jnp.where(cnt > 0, tre, jnp.float32(-1.0))


def target_registration_error(landmarks0, landmarks1, counts=None, *, norm='l1',
                              k_blk_max=_K_BLK_MAX):
    """Pallas implementation of TargetRegistrationError.forward.

    landmarks0, landmarks1: (B, D, K) landmark coordinates.
    counts: (B,) int32 number of valid landmarks per item (0 -> output -1).
    Returns (B,) float32 per-item target registration errors.
    """
    assert landmarks0.shape == landmarks1.shape and landmarks0.ndim == 3
    B, D, K = landmarks0.shape
    if counts is None:
        counts = jnp.full((B,), K, dtype=jnp.int32)
    # Clamp so counts > K cannot pull zero-padded landmarks into the denominator.
    counts = jnp.clip(counts.astype(jnp.int32), 0, K)

    # Pad batch to the sublane tile, landmarks to lane-dense multiples of 128.
    b_pad = -(-B // _TB) * _TB
    k_pad = max(_LANE, -(-K // _LANE) * _LANE)
    k_blk = min(k_pad, max(_LANE, k_blk_max))
    k_pad = -(-k_pad // k_blk) * k_blk
    nb, nk = b_pad // _TB, k_pad // k_blk

    pad = ((0, b_pad - B), (0, 0), (0, k_pad - K))
    lm0 = jnp.transpose(jnp.pad(landmarks0, pad), (1, 0, 2))   # (D, B_pad, K_pad)
    lm1 = jnp.transpose(jnp.pad(landmarks1, pad), (1, 0, 2))
    cnt = jnp.pad(counts, (0, b_pad - B)).reshape(b_pad, 1)

    out = pl.pallas_call(
        functools.partial(_tre_kernel, norm=norm),
        out_shape=jax.ShapeDtypeStruct((b_pad, 1), jnp.float32),
        grid=(nb, nk),
        in_specs=[
            pl.BlockSpec((_TB, 1), lambda b, k: (b, 0)),            # counts block
            pl.BlockSpec((D, _TB, k_blk), lambda b, k: (0, b, k)),  # lm0 tile
            pl.BlockSpec((D, _TB, k_blk), lambda b, k: (0, b, k)),  # lm1 tile
        ],
        out_specs=pl.BlockSpec((_TB, 1), lambda b, k: (b, 0)),      # per-batch-block TREs
        compiler_params=pltpu.CompilerParams(
            # Batch blocks own disjoint output tiles -> safe for v7x megacore;
            # the K axis carries the accumulator.
            dimension_semantics=("parallel", "arbitrary"),
        ),
    )(cnt, lm0, lm1)
    return out.reshape(b_pad)[:B]


def _tre_ref(lm0, lm1, counts, norm):
    """Pure-JAX reference mirroring the PyTorch module."""
    lm0 = jnp.asarray(lm0, jnp.float32)
    lm1 = jnp.asarray(lm1, jnp.float32)
    B, D, K = lm0.shape
    mask = jnp.arange(K)[None, :] < counts[:, None]
    d = jnp.sqrt(jnp.sum((lm0 - lm1) ** 2, axis=1))           # (B, K)
    s = jnp.sum(jnp.where(mask, d, 0.0), axis=1)
    m = s / jnp.maximum(counts, 1).astype(jnp.float32)
    if norm == 'l2':
        m = m * m
    return jnp.where(counts > 0, m, -1.0)


if __name__ == "__main__":
    key = jax.random.PRNGKey(0)
    k0, k1, k2, k3, k4, k5 = jax.random.split(key, 6)

    # Case 1: batch=4, 3-D landmarks, up to 20 per image; item 2 has no landmarks (None).
    B, D, K = 4, 3, 20
    lm0 = jax.random.normal(k0, (B, D, K), jnp.float32) * 10.0
    lm1 = lm0 + jax.random.normal(k1, (B, D, K), jnp.float32)
    counts = jnp.array([20, 12, 0, 20], jnp.int32)
    for norm in ("l1", "l2"):
        out = jax.block_until_ready(target_registration_error(lm0, lm1, counts, norm=norm))
        ref = jax.block_until_ready(_tre_ref(lm0, lm1, counts, norm))
        assert jnp.allclose(out, ref, rtol=1e-5, atol=1e-5), (norm, out, ref)

    # Case 2: larger landmark count, single K block (nk == 1, straight-line path).
    B2, K2 = 2, 640
    lm0b = jax.random.normal(k2, (B2, D, K2), jnp.float32) * 5.0
    lm1b = lm0b + jax.random.normal(k3, (B2, D, K2), jnp.float32)
    counts2 = jnp.array([640, 517], jnp.int32)
    out2 = jax.block_until_ready(target_registration_error(lm0b, lm1b, counts2, norm="l1"))
    ref2 = jax.block_until_ready(_tre_ref(lm0b, lm1b, counts2, "l1"))
    assert jnp.allclose(out2, ref2, rtol=1e-5, atol=1e-5), (out2, ref2)

    # Case 3: B > 8 and forced small K blocks -> exercises batch tiling, batch padding
    # and the multi-step K accumulator path.
    B3, D3, K3 = 10, 2, 300
    lm0c = jax.random.normal(k4, (B3, D3, K3), jnp.float32) * 3.0
    lm1c = lm0c + jax.random.normal(k5, (B3, D3, K3), jnp.float32)
    counts3 = jnp.array([300, 0, 37, 250, 1, 300, 128, 129, 64, 5], jnp.int32)
    out3 = jax.block_until_ready(
        target_registration_error(lm0c, lm1c, counts3, norm="l2", k_blk_max=128))
    ref3 = jax.block_until_ready(_tre_ref(lm0c, lm1c, counts3, "l2"))
    assert jnp.allclose(out3, ref3, rtol=1e-5, atol=1e-5), (out3, ref3)

    print("KERNEL_OK")
</pallas_src>

<mosaic_0001>
module attributes {stable_mosaic.version = 11 : i64} {
  func.func @_tre_kernel(%arg0: i32, %arg1: i32, %arg2: memref<8x1xi32, #tpu.memory_space<vmem>>, %arg3: memref<3x8x128xf32, #tpu.memory_space<vmem>>, %arg4: memref<3x8x128xf32, #tpu.memory_space<vmem>>, %arg5: memref<8x1xf32, #tpu.memory_space<vmem>>) attributes {dimension_semantics = [#tpu.dimension_semantics<parallel>, #tpu.dimension_semantics<arbitrary>], iteration_bounds = array<i64: 1, 1>, scalar_prefetch = 0 : i64, scratch_operands = 0 : i64, tpu.core_type = #tpu.core_type<tc>, window_params = [{transform_indices = @transform_0, window_bounds = array<i64: 8, 1>}, {transform_indices = @transform_1, window_bounds = array<i64: 3, 8, 128>}, {transform_indices = @transform_2, window_bounds = array<i64: 3, 8, 128>}, {transform_indices = @transform_3, window_bounds = array<i64: 8, 1>}]} {
    %c0_i32 = arith.constant 0 : i32
    %0 = arith.cmpi eq, %arg1, %c0_i32 : i32
    %1 = arith.extui %0 : i1 to i32
    %c0_i32_0 = arith.constant 0 : i32
    %2 = arith.cmpi ne, %1, %c0_i32_0 : i32
    scf.if %2 {
      %cst_16 = arith.constant 0.000000e+00 : f32
      %26 = vector.broadcast %cst_16 : f32 to vector<8x1xf32>
      %c0_17 = arith.constant 0 : index
      %c0_18 = arith.constant 0 : index
      %27 = vector.load %arg5[%c0_17, %c0_18] : memref<8x1xf32, #tpu.memory_space<vmem>>, vector<8x1xf32>
      tpu.vector_store %arg5[%c0_17, %c0_18], %26 {strides = array<i32>} : memref<8x1xf32, #tpu.memory_space<vmem>>, vector<8x1xf32>,
    } else {
    }
    %c0 = arith.constant 0 : index
    %c0_1 = arith.constant 0 : index
    %c0_2 = arith.constant 0 : index
    %3 = vector.load %arg3[%c0, %c0_1, %c0_2] : memref<3x8x128xf32, #tpu.memory_space<vmem>>, vector<3x8x128xf32>
    %c0_3 = arith.constant 0 : index
    %c0_4 = arith.constant 0 : index
    %c0_5 = arith.constant 0 : index
    %4 = vector.load %arg4[%c0_3, %c0_4, %c0_5] : memref<3x8x128xf32, #tpu.memory_space<vmem>>, vector<3x8x128xf32>
    %5 = arith.subf %3, %4 : vector<3x8x128xf32>
    %6 = arith.mulf %5, %5 : vector<3x8x128xf32>
    %cst = arith.constant dense<0.000000e+00> : vector<8x128xf32>
    %7 = vector.multi_reduction <add>, %6, %cst [0] : vector<3x8x128xf32> to vector<8x128xf32>
    %8 = math.sqrt %7 : vector<8x128xf32>
    %c0_6 = arith.constant 0 : index
    %c0_7 = arith.constant 0 : index
    %9 = vector.load %arg2[%c0_6, %c0_7] : memref<8x1xi32, #tpu.memory_space<vmem>>, vector<8x1xi32>
    %10 = tpu.iota {dimensions = array<i32: 1>} : vector<8x128xi32>
    %c128_i32 = arith.constant 128 : i32
    %11 = arith.muli %arg1, %c128_i32 : i32
    %12 = vector.broadcast %11 : i32 to vector<8x128xi32>
    %13 = arith.addi %10, %12 : vector<8x128xi32>
    %14 = vector.broadcast %9 : vector<8x1xi32> to vector<8x128xi32>
    %15 = arith.cmpi slt, %13, %14 : vector<8x128xi32>
    %cst_8 = arith.constant 0.000000e+00 : f32
    %16 = vector.broadcast %cst_8 : f32 to vector<8x128xf32>
    %17 = arith.select %15, %8, %16 : vector<8x128xi1>, vector<8x128xf32>
    %c0_9 = arith.constant 0 : index
    %c0_10 = arith.constant 0 : index
    %18 = vector.load %arg5[%c0_9, %c0_10] : memref<8x1xf32, #tpu.memory_space<vmem>>, vector<8x1xf32>
    %cst_11 = arith.constant dense<0.000000e+00> : vector<8xf32>
    %19 = vector.multi_reduction <add>, %17, %cst_11 [1] : vector<8x128xf32> to vector<8xf32>
    %20 = vector.shape_cast %19 : vector<8xf32> to vector<8x1xf32>
    %21 = arith.addf %18, %20 : vector<8x1xf32>
    %c0_12 = arith.constant 0 : index
    %c0_13 = arith.constant 0 : index
    %22 = vector.load %arg5[%c0_12, %c0_13] : memref<8x1xf32, #tpu.memory_space<vmem>>, vector<8x1xf32>
    tpu.vector_store %arg5[%c0_12, %c0_13], %21 {strides = array<i32>} : memref<8x1xf32, #tpu.memory_space<vmem>>, vector<8x1xf32>,
    %c0_i32_14 = arith.constant 0 : i32
    %23 = arith.cmpi eq, %arg1, %c0_i32_14 : i32
    %24 = arith.extui %23 : i1 to i32
    %c0_i32_15 = arith.constant 0 : i32
    %25 = arith.cmpi ne, %24, %c0_i32_15 : i32
    scf.if %25 {
      %c1_i32 = arith.constant 1 : i32
      %26 = vector.broadcast %c1_i32 : i32 to vector<8x1xi32>
      %27 = arith.maxsi %9, %26 : vector<8x1xi32>
      %28 = arith.sitofp %27 : vector<8x1xi32> to vector<8x1xf32>
      %c0_16 = arith.constant 0 : index
      %c0_17 = arith.constant 0 : index
      %29 = vector.load %arg5[%c0_16, %c0_17] : memref<8x1xf32, #tpu.memory_space<vmem>>, vector<8x1xf32>
      %30 = arith.divf %29, %28 : vector<8x1xf32>
      %c0_i32_18 = arith.constant 0 : i32
      %31 = vector.broadcast %c0_i32_18 : i32 to vector<8x1xi32>
      %32 = arith.cmpi sgt, %9, %31 : vector<8x1xi32>
      %cst_19 = arith.constant -1.000000e+00 : f32
      %33 = vector.broadcast %cst_19 : f32 to vector<8x1xf32>
      %34 = arith.select %32, %30, %33 : vector<8x1xi1>, vector<8x1xf32>
      %c0_20 = arith.constant 0 : index
      %c0_21 = arith.constant 0 : index
      %35 = vector.load %arg5[%c0_20, %c0_21] : memref<8x1xf32, #tpu.memory_space<vmem>>, vector<8x1xf32>
      tpu.vector_store %arg5[%c0_20, %c0_21], %34 {strides = array<i32>} : memref<8x1xf32, #tpu.memory_space<vmem>>, vector<8x1xf32>,
    } else {
    }
    return
  }
  func.func @transform_0(%arg0: i32, %arg1: i32) -> (i32, i32) {
    %c0_i32 = arith.constant 0 : i32
    %c0_i32_0 = arith.constant 0 : i32
    return %arg0, %c0_i32 : i32, i32
  }
  func.func @transform_1(%arg0: i32, %arg1: i32) -> (i32, i32, i32) {
    %c0_i32 = arith.constant 0 : i32
    %c0_i32_0 = arith.constant 0 : i32
    return %c0_i32, %arg0, %arg1 : i32, i32, i32
  }
  func.func @transform_2(%arg0: i32, %arg1: i32) -> (i32, i32, i32) {
    %c0_i32 = arith.constant 0 : i32
    %c0_i32_0 = arith.constant 0 : i32
    return %c0_i32, %arg0, %arg1 : i32, i32, i32
  }
  func.func @transform_3(%arg0: i32, %arg1: i32) -> (i32, i32) {
    %c0_i32 = arith.constant 0 : i32
    %c0_i32_0 = arith.constant 0 : i32
    return %arg0, %c0_i32 : i32, i32
  }
}

</mosaic_0001>

<llo_original>
// kernel: tpu_custom_call.1
$region0: #{tpu_custom_call.1}
  #allocation0 [shape = 'u32[]', space=smem, size = 0x4, offset = 0x4, fixed_abs, tag = 'smem constant byte address 0x4 - core index']
  #allocation1 [shape = 'u32[72,128]{1,0:T(1,128)}', space=vmem, size = 0x9000, scoped, tag = 'internal scratch']
  %s0 = inlined_call_operand.vmem [shape: s32[8,1], index: 0, kind: input, shape index: {}]
  %s1 = inlined_call_operand.hbm [shape: f32[3,8,128], index: 1, kind: input, shape index: {}]
  %s2 = inlined_call_operand.hbm [shape: f32[3,8,128], index: 2, kind: input, shape index: {}]
  %s3 = inlined_call_operand.vmem [shape: f32[8,1], index: 3, kind: output, shape index: {}]
  %s4 = sld [smem:[#allocation0]]
  $region38: #{tpu_custom_call.1} parent=0
    _
  %s6 = ssub.s32 1, %s4
  %s7 = scalar_select 0, %s6, %s4
  $region1: #{tpu_custom_call.1} parent=0
    #allocation2 [shape = 'u8[12288]{0}', space=vmem, size = 0x3000, scoped, tag = 'input window, operand 1, single buffered']
    #allocation3 [shape = 's32[1]{0}', space=sflag, size = 0x4, scoped, tag = 'scoped memory for tpu_custom_call.1']
    #allocation4 [shape = 'u8[12288]{0}', space=vmem, size = 0x3000, scoped, tag = 'input window, operand 2, single buffered']
    #allocation5 [shape = 's32[1]{0}', space=sflag, size = 0x4, scoped, tag = 'scoped memory for tpu_custom_call.1']
    %8 = vsyncpa [#allocation3], 0
    %9 = vsyncpa [#allocation5], 0
    // Predicated region
    $region2: #{tpu_custom_call.1} parent=1 // pred_check
      _
    $region3: #{tpu_custom_call.1} parent=1 // pred_check_branch
      %11 = sbr.rel (0) target = $region5
    $region4: #{tpu_custom_call.1} parent=1 // pred_region
      _
    $region5: #{tpu_custom_call.1} parent=1 // pred_fallthru
      _
    // Predicated region
    $region6: #{tpu_custom_call.1} parent=1 // pred_check
      _
    $region7: #{tpu_custom_call.1} parent=1 // pred_check_branch
      %13 = sbr.rel (0) target = $region9
    $region8: #{tpu_custom_call.1} parent=1 // pred_region
      %15 = vsyncadd [#allocation3], 0
      %s16 = sshll.u32 %s1, 4
      %s17 = int_to_ptr.hbm [resolvable:$true] %s16
      %s18 = sshll.u32 [#allocation2], 4
      %s19 = int_to_ptr.vmem [resolvable:$true] %s18
      %24 = dma.hbm_to_vmem [thread:$0]  %s17, 384, %s19, [#allocation3], 128, 128, 8
    $region9: #{tpu_custom_call.1} parent=1 // pred_fallthru
      _
    // Predicated region
    $region10: #{tpu_custom_call.1} parent=1 // pred_check
      _
    $region11: #{tpu_custom_call.1} parent=1 // pred_check_branch
      %26 = sbr.rel (0) target = $region13
    $region12: #{tpu_custom_call.1} parent=1 // pred_region
      %28 = vsyncadd [#allocation5], 0
      %s29 = sshll.u32 %s2, 4
      %s30 = int_to_ptr.hbm [resolvable:$true] %s29
      %s31 = sshll.u32 [#allocation4], 4
      %s32 = int_to_ptr.vmem [resolvable:$true] %s31
      %37 = dma.hbm_to_vmem [thread:$0]  %s30, 384, %s32, [#allocation5], 128, 128, 8
    $region13: #{tpu_custom_call.1} parent=1 // pred_fallthru
      _
    // Predicated region
    $region14: #{tpu_custom_call.1} parent=1 // pred_check
      _
    $region15: #{tpu_custom_call.1} parent=1 // pred_check_branch
      %39 = sbr.rel (0) target = $region17
    $region16: #{tpu_custom_call.1} parent=1 // pred_region
      %41 = dma.done [#allocation3], 384
    $region17: #{tpu_custom_call.1} parent=1 // pred_fallthru
      _
    // Predicated region
    $region18: #{tpu_custom_call.1} parent=1 // pred_check
      _
    $region19: #{tpu_custom_call.1} parent=1 // pred_check_branch
      %43 = sbr.rel (0) target = $region21
    $region20: #{tpu_custom_call.1} parent=1 // pred_region
      %45 = dma.done [#allocation5], 384
    $region21: #{tpu_custom_call.1} parent=1 // pred_fallthru
      _
    %p46 = scmp.eq.s32.totalorder 0, 0
    // Predicated region
    $region22: #{tpu_custom_call.1} parent=1 // pred_check
      %p47 = pneg %p46
    $region23: #{tpu_custom_call.1} parent=1 // pred_check_branch
      %49 = sbr.rel (%p47) target = $region25
    $region24: #{tpu_custom_call.1} parent=1 // pred_region
      %vm50 = vcmask 7168
      %51 = vst.msk [vmem:[%s3] sm:$0xff] %vm50, 0.0
    $region25: #{tpu_custom_call.1} parent=1 // pred_fallthru
      _
    %v52 = vld [vmem:[#allocation2] sm:$0xff]
    %v53 = vld [vmem:[#allocation2 + $0x8] sm:$0xff]
    %v54 = vld [vmem:[#allocation2 + $0x10] sm:$0xff]
    %v55 = vld [vmem:[#allocation4] sm:$0xff]
    %v56 = vld [vmem:[#allocation4 + $0x8] sm:$0xff]
    %v57 = vld [vmem:[#allocation4 + $0x10] sm:$0xff]
    %v58 = vsub.f32 %v52, %v55
    %v59 = vsub.f32 %v53, %v56
    %v60 = vsub.f32 %v54, %v57
    %v61 = vmul.f32 %v58, %v58
    %v62 = vmul.f32 %v59, %v59
    %v63 = vmul.f32 %v60, %v60
    %v64 = vadd.f32 %v61, %v62
    %v65 = vadd.f32 %v64, %v63
    %v66 = vrsqrt.pop %v65
    %v67 = vmul.f32 %v66, %v65
    %v68 = vmul.f32 %v67, %v66
    %v69 = vmul.f32 0.5, %v68
    %v70 = vsub.f32 1.5, %v69
    %v71 = vmul.f32 %v66, %v70
    %v72 = vmul.f32 %v65, %v71
    %vm73 = vcmp.eq.f32.partialorder %v65, inf
    %v74 = vsel %vm73, %v65, %v72
    %vm75 = vcmp.eq.f32.partialorder %v65, 0.0
    %v76 = vand.u32 %v65, 2147483648
    %v77 = vsel %vm75, %v76, %v74
    %v78 = vld [vmem:[%s0] sm:$0xff]
    %v79 = vlaneseq
    %v80 = vand.u32 %v79, 127
    %s81 = smul.u32 0, 128
    %v82 = vstv %s81
    %v83 = vadd.s32 %v80, %v82
    %84 = vset.pattern.permute.xlu0 0
    %85 = vperm.xlu0 %84, %v78
    %v86 = vpop.permute.xlu0 %85
    %vm87 = vcmp.lt.s32.totalorder %v83, %v86
    %v88 = vsel %vm87, %v77, 0.0
    %v89 = vld [vmem:[%s3] sm:$0xff]
    %90 = vadd.xlane.f32.xlu0 %v88
    %v91 = vpop.xlane.xlu0 %90
    %v92 = vadd.f32 %v89, %v91
    %vm93 = vcmask 7168
    %94 = vst.msk [vmem:[%s3] sm:$0xff] %vm93, %v92
    // Predicated region
    $region26: #{tpu_custom_call.1} parent=1 // pred_check
      %p95 = pneg %p46
    $region27: #{tpu_custom_call.1} parent=1 // pred_check_branch
      %97 = sbr.rel (%p95) target = $region29
    $region28: #{tpu_custom_call.1} parent=1 // pred_region
      %vm98 = vcmp.gt.s32.totalorder %v78, 1
      %v99 = vsel %vm98, %v78, 1
      %v100 = vcvt.s32.f32 %v99
      %v101 = vld [vmem:[%s3] sm:$0xff]
      %v102 = vrcp.pop %v100
      %v103 = vmul.f32 %v100, %v102
      %v104 = vsub.f32 1.0, %v103
      %v105 = vmul.f32 %v102, %v104
      %v106 = vadd.f32 %v102, %v105
      %vm107 = vweird.f32 %v100
      %vm108 = vweird.f32 %v102
      %vm109 = vmor %vm107, %vm108
      %v110 = vsel %vm109, %v102, %v106
      %v111 = vand.u32 2147483647, %v100
      %vm112 = vcmp.eq.f32.partialorder %v111, 8.507059e+37
      %v113 = vand.u32 %v100, 2147483648
      %v114 = vor.u32 1.1754944e-38, %v113
      %v115 = vsel %vm112, %v114, %v110
      %v116 = vmul.f32 %v101, %v115
      %vm117 = vcmp.gt.s32.totalorder %v78, 0
      %v118 = vsel %vm117, %v116, -1.0
      %119 = vst.msk [vmem:[%s3] sm:$0xff] %vm93, %v118
    $region29: #{tpu_custom_call.1} parent=1 // pred_fallthru
      _
    // Predicated region
    $region30: #{tpu_custom_call.1} parent=1 // pred_check
      _
    $region31: #{tpu_custom_call.1} parent=1 // pred_check_branch
      %121 = sbr.rel (0) target = $region33
    $region32: #{tpu_custom_call.1} parent=1 // pred_region
      _
    $region33: #{tpu_custom_call.1} parent=1 // pred_fallthru
      _
    // Predicated region
    $region34: #{tpu_custom_call.1} parent=1 // pred_check
      _
    $region35: #{tpu_custom_call.1} parent=1 // pred_check_branch
      %123 = sbr.rel (0) target = $region37
    $region36: #{tpu_custom_call.1} parent=1 // pred_region
      _
    $region37: #{tpu_custom_call.1} parent=1 // pred_fallthru
      _
    %124 = vsyncpa [#allocation3], 1
    %125 = vsyncpa [#allocation5], 1

</llo_original>
